<compile_context>
chip_gen: v7x
topology: tpu7x:2x2x1
jax: 0.10.0
libtpu: 0.0.40
codegen_flags: <defaults>
</compile_context>

<pallas_src>
import jax
import jax.numpy as jnp
from jax.experimental import pallas as pl
from jax.experimental.pallas import tpu as pltpu

LANE = 128   # TPU lane width; hidden dims (30/10/30) are zero-padded up to this.


def _round_up(n, m):
    return ((n + m - 1) // m) * m


def _pad2(a, shape):
    return jnp.pad(a, ((0, shape[0] - a.shape[0]), (0, shape[1] - a.shape[1])))


def _sigmoid(z):
    # 0.5*(1+tanh(z/2)) == sigmoid(z); tanh runs on the EUP and saturates, so
    # there is no exp overflow / approx-reciprocal-of-inf hazard.
    return 0.5 * (1.0 + jnp.tanh(0.5 * z))


def stacked_ae_kernel(x_ref,
                      w1_ref, b1_ref,
                      w2_ref, b2_ref,
                      w3_ref, b3_ref,
                      w4_ref, b4_ref,
                      o_ref):
    # f32 tile straight from HBM; cast to bf16 in-kernel (VPU has slack) so the
    # wrapper never does a separate pad/cast pass over x.
    x = x_ref[...].astype(jnp.bfloat16)

    # fc1 + sigmoid (bf16 MXU inputs, f32 accumulation, f32 activation).
    z1 = jnp.dot(x, w1_ref[...], preferred_element_type=jnp.float32) + b1_ref[...]
    h1 = _sigmoid(z1).astype(jnp.bfloat16)

    # dropout(0.5) -> identity (eval mode)

    # fc2 + sigmoid
    z2 = jnp.dot(h1, w2_ref[...], preferred_element_type=jnp.float32) + b2_ref[...]
    h2 = _sigmoid(z2).astype(jnp.bfloat16)

    # fc3 + sigmoid
    z3 = jnp.dot(h2, w3_ref[...], preferred_element_type=jnp.float32) + b3_ref[...]
    h3 = _sigmoid(z3).astype(jnp.bfloat16)

    # fc4 (no activation)
    out = jnp.dot(h3, w4_ref[...], preferred_element_type=jnp.float32) + b4_ref[...]
    o_ref[...] = out.astype(o_ref.dtype)


def _resident_spec(shape):
    """Whole-array-resident BlockSpec (constant index map).

    Requests single buffering (pl.Buffered(1)) since the block never changes;
    falls back to the default if this Pallas build lacks pipeline_mode.
    """
    index_map = lambda i: (0,) * len(shape)
    try:
        return pl.BlockSpec(shape, index_map, pipeline_mode=pl.Buffered(1))
    except TypeError:
        return pl.BlockSpec(shape, index_map)


def stacked_ae_forward(x, params, *, block_b=None, out_dtype=jnp.float32):
    """x: (B, nb_movies) float32. params: logical (in,out) weights, (1,out) biases."""
    B, nb_movies = x.shape
    H = LANE                                # padded hidden width (covers 30/10/30)
    F_pad = _round_up(nb_movies, LANE)      # lane-padded width, for VMEM estimates only

    # Zero-padded bf16 weights. Padding is exact: padded weight rows/cols are
    # zero, so sigmoid(0)=0.5 in padded hidden columns multiplies zero weight
    # rows downstream and contributes nothing. x itself is NOT padded: its
    # block's last dim equals the full array dim (legal), and w1/w4 keep
    # nb_movies as their logical contraction/output dim, so no in-kernel lane
    # mask is needed (no OOB lane reads anywhere).
    w1 = _pad2(params["w1"], (nb_movies, H)).astype(jnp.bfloat16)
    w2 = _pad2(params["w2"], (H, H)).astype(jnp.bfloat16)
    w3 = _pad2(params["w3"], (H, H)).astype(jnp.bfloat16)
    w4 = _pad2(params["w4"], (H, nb_movies)).astype(jnp.bfloat16)
    b1 = _pad2(params["b1"], (1, H)).astype(jnp.float32)
    b2 = _pad2(params["b2"], (1, H)).astype(jnp.float32)
    b3 = _pad2(params["b3"], (1, H)).astype(jnp.float32)
    b4 = params["b4"].astype(jnp.float32)   # (1, nb_movies), no padding needed

    x_isz = 4                               # f32 input tile bytes/elem
    o_isz = jnp.dtype(out_dtype).itemsize
    wb_bytes = ((w1.size + w2.size + w3.size + w4.size) * 2
                + (b1.size + b2.size + b3.size + b4.size) * 4)

    try:
        vmem_cap = int(pltpu.get_tpu_info().vmem_capacity_bytes)
    except Exception:
        vmem_cap = 64 << 20                 # conservative fallback (v7x per-TC VMEM)

    if block_b is None:
        # Per-row VMEM for double-buffered in/out tiles (lane-padded layout).
        row_bytes = 2 * F_pad * x_isz + 2 * F_pad * o_isz
        budget = max(1 << 20, vmem_cap // 2 - 2 * wb_bytes - (6 << 20))
        cap_rows = max(8, (budget // row_bytes) // 8 * 8)
        # v5e/v6e (128 MiB VMEM): big tiles amortize per-grid-step overhead.
        # v7x (64 MiB): cap at 256 so buffers + compiler scratch always fit.
        cap_rows = min(cap_rows, 1024 if vmem_cap >= (96 << 20) else 256)
        # >=2 grid steps whenever B allows, so both v7x TensorCores get work.
        block_b = min(cap_rows, max(8, _round_up(pl.cdiv(B, 2), 8)))
    block_b = max(8, _round_up(min(block_b, _round_up(B, 8)), 8))

    grid = (pl.cdiv(B, block_b),)

    # Tight VMEM request: actual double-buffered tiles + resident weights +
    # headroom for intermediates / compiler scratch (not a blanket 48 MiB).
    need = (2 * block_b * F_pad * x_isz + 2 * block_b * F_pad * o_isz
            + 2 * wb_bytes + (8 << 20))
    vmem_bytes = int(min(max(need, 16 << 20), vmem_cap - (8 << 20)))

    cost = pl.CostEstimate(
        flops=2 * B * (nb_movies * H + H * H + H * H + H * nb_movies),
        transcendentals=3 * B * H,
        bytes_accessed=B * nb_movies * (x_isz + o_isz) + wb_bytes,
    )

    out = pl.pallas_call(
        stacked_ae_kernel,
        out_shape=jax.ShapeDtypeStruct((B, nb_movies), out_dtype),
        grid_spec=pltpu.PrefetchScalarGridSpec(
            num_scalar_prefetch=0,
            grid=grid,
            in_specs=[
                pl.BlockSpec((block_b, nb_movies), lambda i: (i, 0)),  # x batch tile
                _resident_spec(w1.shape), _resident_spec(b1.shape),
                _resident_spec(w2.shape), _resident_spec(b2.shape),
                _resident_spec(w3.shape), _resident_spec(b3.shape),
                _resident_spec(w4.shape), _resident_spec(b4.shape),
            ],
            out_specs=pl.BlockSpec((block_b, nb_movies), lambda i: (i, 0)),
        ),
        compiler_params=pltpu.CompilerParams(
            dimension_semantics=("parallel",),
            vmem_limit_bytes=vmem_bytes,
        ),
        cost_estimate=cost,
    )(x, w1, b1, w2, b2, w3, b3, w4, b4)

    return out  # (B, nb_movies), no post-kernel slice needed


def init_params(key, nb_movies):
    """PyTorch-style uniform(-1/sqrt(fan_in), 1/sqrt(fan_in)) init.

    Weights stored transposed vs. nn.Linear: (in_features, out_features).
    """
    dims = [(nb_movies, 30), (30, 10), (10, 30), (30, nb_movies)]
    params = {}
    keys = jax.random.split(key, 2 * len(dims))
    for idx, (fan_in, fan_out) in enumerate(dims):
        bound = 1.0 / jnp.sqrt(jnp.array(fan_in, jnp.float32))
        w = jax.random.uniform(keys[2 * idx], (fan_in, fan_out),
                               jnp.float32, -bound, bound)
        b = jax.random.uniform(keys[2 * idx + 1], (1, fan_out),
                               jnp.float32, -bound, bound)
        params[f"w{idx + 1}"] = w
        params[f"b{idx + 1}"] = b
    return params


def reference_forward(x, params, *, compute_dtype=jnp.float32):
    """Pure-JAX reference. compute_dtype=bf16 mirrors the kernel's MXU inputs."""
    def lin(h, w, b):
        return jnp.dot(h.astype(compute_dtype), w.astype(compute_dtype),
                       preferred_element_type=jnp.float32) + b
    h = jax.nn.sigmoid(lin(x, params["w1"], params["b1"]))
    # dropout(0.5) -> identity (eval mode)
    h = jax.nn.sigmoid(lin(h, params["w2"], params["b2"]))
    h = jax.nn.sigmoid(lin(h, params["w3"], params["b3"]))
    return lin(h, params["w4"], params["b4"])


if __name__ == "__main__":
    nb_movies = 200   # synthetic stand-in (deliberately not a multiple of 128)
    batch = 50        # deliberately not a multiple of the batch tile (partial block path)

    key = jax.random.PRNGKey(0)
    k_x, k_p = jax.random.split(key)
    # Ratings in [0, 5], like the MovieLens user-vector inputs.
    x = jax.random.uniform(k_x, (batch, nb_movies), jnp.float32, 0.0, 5.0)
    params = init_params(k_p, nb_movies)

    fwd = jax.jit(stacked_ae_forward)
    out = jax.block_until_ready(fwd(x, params))
    assert out.shape == (batch, nb_movies)

    # Precision-matched reference (bf16 operands, f32 accumulation).
    ref_bf16 = reference_forward(x, params, compute_dtype=jnp.bfloat16)
    assert jnp.allclose(out, ref_bf16, atol=3e-2, rtol=3e-2), \
        "mismatch vs bf16-matched reference"

    # Loose sanity check against the exact f32 reference.
    ref_f32 = reference_forward(x, params, compute_dtype=jnp.float32)
    assert jnp.allclose(out, ref_f32, atol=1e-1, rtol=1e-1), \
        "mismatch vs f32 reference"

    print("KERNEL_OK")
</pallas_src>

<mosaic_0001>
module attributes {stable_mosaic.version = 11 : i64} {
  func.func @stacked_ae_kernel(%arg0: i32, %arg1: memref<32x200xf32, #tpu.memory_space<vmem>>, %arg2: memref<200x128xbf16, #tpu.memory_space<vmem>>, %arg3: memref<1x128xf32, #tpu.memory_space<vmem>>, %arg4: memref<128x128xbf16, #tpu.memory_space<vmem>>, %arg5: memref<1x128xf32, #tpu.memory_space<vmem>>, %arg6: memref<128x128xbf16, #tpu.memory_space<vmem>>, %arg7: memref<1x128xf32, #tpu.memory_space<vmem>>, %arg8: memref<128x200xbf16, #tpu.memory_space<vmem>>, %arg9: memref<1x200xf32, #tpu.memory_space<vmem>>, %arg10: memref<32x200xf32, #tpu.memory_space<vmem>>) attributes {dimension_semantics = [#tpu.dimension_semantics<parallel>], iteration_bounds = array<i64: 2>, scalar_prefetch = 0 : i64, scratch_operands = 0 : i64, tpu.core_type = #tpu.core_type<tc>, window_params = [{transform_indices = @transform_0, window_bounds = array<i64: 32, 200>}, {pipeline_mode = #tpu.pipeline_mode<synchronous>, transform_indices = @transform_1, window_bounds = array<i64: 200, 128>}, {pipeline_mode = #tpu.pipeline_mode<synchronous>, transform_indices = @transform_2, window_bounds = array<i64: 1, 128>}, {pipeline_mode = #tpu.pipeline_mode<synchronous>, transform_indices = @transform_3, window_bounds = array<i64: 128, 128>}, {pipeline_mode = #tpu.pipeline_mode<synchronous>, transform_indices = @transform_4, window_bounds = array<i64: 1, 128>}, {pipeline_mode = #tpu.pipeline_mode<synchronous>, transform_indices = @transform_5, window_bounds = array<i64: 128, 128>}, {pipeline_mode = #tpu.pipeline_mode<synchronous>, transform_indices = @transform_6, window_bounds = array<i64: 1, 128>}, {pipeline_mode = #tpu.pipeline_mode<synchronous>, transform_indices = @transform_7, window_bounds = array<i64: 128, 200>}, {pipeline_mode = #tpu.pipeline_mode<synchronous>, transform_indices = @transform_8, window_bounds = array<i64: 1, 200>}, {transform_indices = @transform_9, window_bounds = array<i64: 32, 200>}]} {
    %c0 = arith.constant 0 : index
    %c0_0 = arith.constant 0 : index
    %0 = vector.load %arg1[%c0, %c0_0] : memref<32x200xf32, #tpu.memory_space<vmem>>, vector<32x200xf32>
    %1 = arith.truncf %0 : vector<32x200xf32> to vector<32x200xbf16>
    %c0_1 = arith.constant 0 : index
    %c0_2 = arith.constant 0 : index
    %2 = vector.load %arg2[%c0_1, %c0_2] : memref<200x128xbf16, #tpu.memory_space<vmem>>, vector<200x128xbf16>
    %cst = arith.constant dense<0.000000e+00> : vector<32x128xf32>
    %3 = tpu.matmul %1, %2, %cst {dimension_numbers = #tpu.dot_dimension_numbers<[1], [0], [0], [1], [0, 0, 1, 1], [], []>} : vector<32x200xbf16>, vector<200x128xbf16>, vector<32x128xf32> -> vector<32x128xf32>
    %c0_3 = arith.constant 0 : index
    %c0_4 = arith.constant 0 : index
    %4 = vector.load %arg3[%c0_3, %c0_4] : memref<1x128xf32, #tpu.memory_space<vmem>>, vector<1x128xf32>
    %5 = vector.broadcast %4 : vector<1x128xf32> to vector<32x128xf32>
    %6 = arith.addf %3, %5 : vector<32x128xf32>
    %cst_5 = arith.constant 5.000000e-01 : f32
    %7 = vector.broadcast %cst_5 : f32 to vector<32x128xf32>
    %8 = arith.mulf %7, %6 : vector<32x128xf32>
    %9 = math.tanh %8 : vector<32x128xf32>
    %cst_6 = arith.constant 1.000000e+00 : f32
    %10 = vector.broadcast %cst_6 : f32 to vector<32x128xf32>
    %11 = arith.addf %10, %9 : vector<32x128xf32>
    %cst_7 = arith.constant 5.000000e-01 : f32
    %12 = vector.broadcast %cst_7 : f32 to vector<32x128xf32>
    %13 = arith.mulf %12, %11 : vector<32x128xf32>
    %14 = arith.truncf %13 : vector<32x128xf32> to vector<32x128xbf16>
    %c0_8 = arith.constant 0 : index
    %c0_9 = arith.constant 0 : index
    %15 = vector.load %arg4[%c0_8, %c0_9] : memref<128x128xbf16, #tpu.memory_space<vmem>>, vector<128x128xbf16>
    %cst_10 = arith.constant dense<0.000000e+00> : vector<32x128xf32>
    %16 = tpu.matmul %14, %15, %cst_10 {dimension_numbers = #tpu.dot_dimension_numbers<[1], [0], [0], [1], [0, 0, 1, 1], [], []>} : vector<32x128xbf16>, vector<128x128xbf16>, vector<32x128xf32> -> vector<32x128xf32>
    %c0_11 = arith.constant 0 : index
    %c0_12 = arith.constant 0 : index
    %17 = vector.load %arg5[%c0_11, %c0_12] : memref<1x128xf32, #tpu.memory_space<vmem>>, vector<1x128xf32>
    %18 = vector.broadcast %17 : vector<1x128xf32> to vector<32x128xf32>
    %19 = arith.addf %16, %18 : vector<32x128xf32>
    %cst_13 = arith.constant 5.000000e-01 : f32
    %20 = vector.broadcast %cst_13 : f32 to vector<32x128xf32>
    %21 = arith.mulf %20, %19 : vector<32x128xf32>
    %22 = math.tanh %21 : vector<32x128xf32>
    %cst_14 = arith.constant 1.000000e+00 : f32
    %23 = vector.broadcast %cst_14 : f32 to vector<32x128xf32>
    %24 = arith.addf %23, %22 : vector<32x128xf32>
    %cst_15 = arith.constant 5.000000e-01 : f32
    %25 = vector.broadcast %cst_15 : f32 to vector<32x128xf32>
    %26 = arith.mulf %25, %24 : vector<32x128xf32>
    %27 = arith.truncf %26 : vector<32x128xf32> to vector<32x128xbf16>
    %c0_16 = arith.constant 0 : index
    %c0_17 = arith.constant 0 : index
    %28 = vector.load %arg6[%c0_16, %c0_17] : memref<128x128xbf16, #tpu.memory_space<vmem>>, vector<128x128xbf16>
    %cst_18 = arith.constant dense<0.000000e+00> : vector<32x128xf32>
    %29 = tpu.matmul %27, %28, %cst_18 {dimension_numbers = #tpu.dot_dimension_numbers<[1], [0], [0], [1], [0, 0, 1, 1], [], []>} : vector<32x128xbf16>, vector<128x128xbf16>, vector<32x128xf32> -> vector<32x128xf32>
    %c0_19 = arith.constant 0 : index
    %c0_20 = arith.constant 0 : index
    %30 = vector.load %arg7[%c0_19, %c0_20] : memref<1x128xf32, #tpu.memory_space<vmem>>, vector<1x128xf32>
    %31 = vector.broadcast %30 : vector<1x128xf32> to vector<32x128xf32>
    %32 = arith.addf %29, %31 : vector<32x128xf32>
    %cst_21 = arith.constant 5.000000e-01 : f32
    %33 = vector.broadcast %cst_21 : f32 to vector<32x128xf32>
    %34 = arith.mulf %33, %32 : vector<32x128xf32>
    %35 = math.tanh %34 : vector<32x128xf32>
    %cst_22 = arith.constant 1.000000e+00 : f32
    %36 = vector.broadcast %cst_22 : f32 to vector<32x128xf32>
    %37 = arith.addf %36, %35 : vector<32x128xf32>
    %cst_23 = arith.constant 5.000000e-01 : f32
    %38 = vector.broadcast %cst_23 : f32 to vector<32x128xf32>
    %39 = arith.mulf %38, %37 : vector<32x128xf32>
    %40 = arith.truncf %39 : vector<32x128xf32> to vector<32x128xbf16>
    %c0_24 = arith.constant 0 : index
    %c0_25 = arith.constant 0 : index
    %41 = vector.load %arg8[%c0_24, %c0_25] : memref<128x200xbf16, #tpu.memory_space<vmem>>, vector<128x200xbf16>
    %cst_26 = arith.constant dense<0.000000e+00> : vector<32x200xf32>
    %42 = tpu.matmul %40, %41, %cst_26 {dimension_numbers = #tpu.dot_dimension_numbers<[1], [0], [0], [1], [0, 0, 1, 1], [], []>} : vector<32x128xbf16>, vector<128x200xbf16>, vector<32x200xf32> -> vector<32x200xf32>
    %c0_27 = arith.constant 0 : index
    %c0_28 = arith.constant 0 : index
    %43 = vector.load %arg9[%c0_27, %c0_28] : memref<1x200xf32, #tpu.memory_space<vmem>>, vector<1x200xf32>
    %44 = vector.broadcast %43 : vector<1x200xf32> to vector<32x200xf32>
    %45 = arith.addf %42, %44 : vector<32x200xf32>
    %c0_29 = arith.constant 0 : index
    %c0_30 = arith.constant 0 : index
    %46 = vector.load %arg10[%c0_29, %c0_30] : memref<32x200xf32, #tpu.memory_space<vmem>>, vector<32x200xf32>
    tpu.vector_store %arg10[%c0_29, %c0_30], %45 {strides = array<i32>} : memref<32x200xf32, #tpu.memory_space<vmem>>, vector<32x200xf32>,
    return
  }
  func.func @transform_0(%arg0: i32) -> (i32, i32) {
    %c0_i32 = arith.constant 0 : i32
    %c0_i32_0 = arith.constant 0 : i32
    return %arg0, %c0_i32 : i32, i32
  }
  func.func @transform_1(%arg0: i32) -> (i32, i32) {
    %c0_i32 = arith.constant 0 : i32
    %c0_i32_0 = arith.constant 0 : i32
    %c0_i32_1 = arith.constant 0 : i32
    return %c0_i32, %c0_i32_0 : i32, i32
  }
  func.func @transform_2(%arg0: i32) -> (i32, i32) {
    %c0_i32 = arith.constant 0 : i32
    %c0_i32_0 = arith.constant 0 : i32
    %c0_i32_1 = arith.constant 0 : i32
    return %c0_i32, %c0_i32_0 : i32, i32
  }
  func.func @transform_3(%arg0: i32) -> (i32, i32) {
    %c0_i32 = arith.constant 0 : i32
    %c0_i32_0 = arith.constant 0 : i32
    %c0_i32_1 = arith.constant 0 : i32
    return %c0_i32, %c0_i32_0 : i32, i32
  }
  func.func @transform_4(%arg0: i32) -> (i32, i32) {
    %c0_i32 = arith.constant 0 : i32
    %c0_i32_0 = arith.constant 0 : i32
    %c0_i32_1 = arith.constant 0 : i32
    return %c0_i32, %c0_i32_0 : i32, i32
  }
  func.func @transform_5(%arg0: i32) -> (i32, i32) {
    %c0_i32 = arith.constant 0 : i32
    %c0_i32_0 = arith.constant 0 : i32
    %c0_i32_1 = arith.constant 0 : i32
    return %c0_i32, %c0_i32_0 : i32, i32
  }
  func.func @transform_6(%arg0: i32) -> (i32, i32) {
    %c0_i32 = arith.constant 0 : i32
    %c0_i32_0 = arith.constant 0 : i32
    %c0_i32_1 = arith.constant 0 : i32
    return %c0_i32, %c0_i32_0 : i32, i32
  }
  func.func @transform_7(%arg0: i32) -> (i32, i32) {
    %c0_i32 = arith.constant 0 : i32
    %c0_i32_0 = arith.constant 0 : i32
    %c0_i32_1 = arith.constant 0 : i32
    return %c0_i32, %c0_i32_0 : i32, i32
  }
  func.func @transform_8(%arg0: i32) -> (i32, i32) {
    %c0_i32 = arith.constant 0 : i32
    %c0_i32_0 = arith.constant 0 : i32
    %c0_i32_1 = arith.constant 0 : i32
    return %c0_i32, %c0_i32_0 : i32, i32
  }
  func.func @transform_9(%arg0: i32) -> (i32, i32) {
    %c0_i32 = arith.constant 0 : i32
    %c0_i32_0 = arith.constant 0 : i32
    return %arg0, %c0_i32 : i32, i32
  }
}

</mosaic_0001>

<llo_original>
// kernel: stacked_ae_forward.1
$region0: #{stacked_ae_forward.1}
  #allocation0 [shape = 'u32[]', space=smem, size = 0x4, offset = 0x4, fixed_abs, tag = 'smem constant byte address 0x4 - core index']
  #allocation1 [shape = 'u32[144,128]{1,0:T(1,128)}', space=vmem, size = 0x12000, scoped, tag = 'internal scratch']
  %s0 = inlined_call_operand.vmem [shape: f32[50,200], index: 0, kind: input, shape index: {}]
  %s1 = inlined_call_operand.vmem [shape: bf16[200,128], index: 1, kind: input, shape index: {}]
  %s2 = inlined_call_operand.vmem [shape: f32[1,128], index: 2, kind: input, shape index: {}]
  %s3 = inlined_call_operand.vmem [shape: bf16[128,128], index: 3, kind: input, shape index: {}]
  %s4 = inlined_call_operand.vmem [shape: f32[1,128], index: 4, kind: input, shape index: {}]
  %s5 = inlined_call_operand.vmem [shape: bf16[128,128], index: 5, kind: input, shape index: {}]
  %s6 = inlined_call_operand.vmem [shape: f32[1,128], index: 6, kind: input, shape index: {}]
  %s7 = inlined_call_operand.vmem [shape: bf16[128,200], index: 7, kind: input, shape index: {}]
  %s8 = inlined_call_operand.vmem [shape: f32[1,200], index: 8, kind: input, shape index: {}]
  %s9 = inlined_call_operand.hbm [shape: f32[50,200], index: 9, kind: output, shape index: {}]
  %s10 = sld [smem:[#allocation0]]
  $region69: #{stacked_ae_forward.1} parent=0
    _
  %s12 = ssub.s32 1, %s10
  %s13 = scalar_select 0, %s12, %s10
  $region1: #{stacked_ae_forward.1} parent=0
    #allocation2 [shape = 'u8[65536]{0}', space=vmem, size = 0x10000, scoped, tag = 'output window, operand 0']
    #allocation3 [shape = 's32[2]{0}', space=sflag, size = 0x8, scoped, tag = 'scoped memory for stacked_ae_forward.1']
    %14 = vsyncpa [#allocation3], 0
    %s15 = scalar_lea.sflag [#allocation3], 1
    %16 = vsyncpa %s15, 0
    loop: start=0, step=1, limit=4
    $region2: #{stacked_ae_forward.1} parent=1 // loop_pre_header
      _
    $region3: #{stacked_ae_forward.1} parent=1 // loop_header
      %s18 = sphi 0, %s22
      %p19 = scmp.ge.s32.totalorder %s18, 4
      %s28 = sphi 0, %s30
      %s31 = sphi 0, %s28
      %s32 = sphi 0, %s31
      %s48 = sphi 0, %s32
      %s52 = sphi 0, %s52
      %s54 = sphi 0, %s52
      %s55 = sphi 0, %s54
      %s69 = sphi 0, %s55
      %s73 = sphi 0, %s73
      %s75 = sphi 0, %s73
      %s76 = sphi 0, %s75
      %s90 = sphi 0, %s76
      %s94 = sphi 0, %s94
      %s96 = sphi 0, %s94
      %s97 = sphi 0, %s96
      %s111 = sphi 0, %s97
      %s115 = sphi 0, %s115
      %s117 = sphi 0, %s115
      %s118 = sphi 0, %s117
      %s132 = sphi 0, %s118
      %s136 = sphi 0, %s136
      %s138 = sphi 0, %s136
      %s139 = sphi 0, %s138
      %s153 = sphi 0, %s139
      %s157 = sphi 0, %s157
      %s159 = sphi 0, %s157
      %s160 = sphi 0, %s159
      %s174 = sphi 0, %s160
      %s178 = sphi 0, %s178
      %s180 = sphi 0, %s178
      %s181 = sphi 0, %s180
      %s195 = sphi 0, %s181
      %s199 = sphi 0, %s199
      %s201 = sphi 0, %s199
      %s202 = sphi 0, %s201
      %s216 = sphi 0, %s202
      %s222 = sphi 0, %s224
      %s225 = sphi 0, %s222
      %s226 = sphi 0, %s225
      %s242 = sphi 0, %s226
    $region4: #{stacked_ae_forward.1} parent=1 // loop_header_branch
      %21 = sbr.rel (%p19) target = $region8
    $region5: #{stacked_ae_forward.1} parent=1 // loop_body
      %s23 = ssub.s32 %s18, 1
      %s24 = ssub.s32 %s18, 2
      %s25 = sadd.s32 %s18, 1
      %s26 = ssub.s32 %s18, %s25
      %p27 = scmp.eq.s32.totalorder %s26, 0
      %s29 = sadd.s32 %s28, 1
      %s30 = scalar_select %p27, %s28, %s29
      %p33 = pneg %p27
      %p34 = scmp.eq.s32.totalorder %s18, 1
      %p35 = por %p33, %p34
      %p36 = scmp.ne.s32.totalorder %s28, %s31
      %p37 = scmp.eq.s32.totalorder %s18, 0
      %p38 = por %p36, %p37
      %p39 = scmp.ne.s32.totalorder %s28, %s31
      %p40 = scmp.eq.s32.totalorder %s23, 1
      %p41 = por %p39, %p40
      %p42 = scmp.ne.s32.totalorder %s31, %s32
      %p43 = scmp.eq.s32.totalorder %s23, 0
      %p44 = por %p42, %p43
      %p45 = scmp.ne.s32.totalorder %s31, %s32
      %p46 = scmp.eq.s32.totalorder %s24, 1
      %p47 = por %p45, %p46
      %p49 = scmp.ne.s32.totalorder %s32, %s48
      %p50 = scmp.eq.s32.totalorder %s24, 0
      %p51 = por %p49, %p50
      %s53 = sadd.s32 %s52, 1
      %p56 = scmp.eq.s32.totalorder %s18, 1
      %p57 = scmp.ne.s32.totalorder %s52, %s54
      %p58 = scmp.eq.s32.totalorder %s18, 0
      %p59 = por %p57, %p58
      %p60 = scmp.ne.s32.totalorder %s52, %s54
      %p61 = scmp.eq.s32.totalorder %s23, 1
      %p62 = por %p60, %p61
      %p63 = scmp.ne.s32.totalorder %s54, %s55
      %p64 = scmp.eq.s32.totalorder %s23, 0
      %p65 = por %p63, %p64
      %p66 = scmp.ne.s32.totalorder %s54, %s55
      %p67 = scmp.eq.s32.totalorder %s24, 1
      %p68 = por %p66, %p67
      %p70 = scmp.ne.s32.totalorder %s55, %s69
      %p71 = scmp.eq.s32.totalorder %s24, 0
      %p72 = por %p70, %p71
      %s74 = sadd.s32 %s73, 1
      %p77 = scmp.eq.s32.totalorder %s18, 1
      %p78 = scmp.ne.s32.totalorder %s73, %s75
      %p79 = scmp.eq.s32.totalorder %s18, 0
      %p80 = por %p78, %p79
      %p81 = scmp.ne.s32.totalorder %s73, %s75
      %p82 = scmp.eq.s32.totalorder %s23, 1
      %p83 = por %p81, %p82
      %p84 = scmp.ne.s32.totalorder %s75, %s76
      %p85 = scmp.eq.s32.totalorder %s23, 0
      %p86 = por %p84, %p85
      %p87 = scmp.ne.s32.totalorder %s75, %s76
      %p88 = scmp.eq.s32.totalorder %s24, 1
      %p89 = por %p87, %p88
      %p91 = scmp.ne.s32.totalorder %s76, %s90
      %p92 = scmp.eq.s32.totalorder %s24, 0
      %p93 = por %p91, %p92
      %s95 = sadd.s32 %s94, 1
      %p98 = scmp.eq.s32.totalorder %s18, 1
      %p99 = scmp.ne.s32.totalorder %s94, %s96
      %p100 = scmp.eq.s32.totalorder %s18, 0
      %p101 = por %p99, %p100
      %p102 = scmp.ne.s32.totalorder %s94, %s96
      %p103 = scmp.eq.s32.totalorder %s23, 1
      %p104 = por %p102, %p103
      %p105 = scmp.ne.s32.totalorder %s96, %s97
      %p106 = scmp.eq.s32.totalorder %s23, 0
      %p107 = por %p105, %p106
      %p108 = scmp.ne.s32.totalorder %s96, %s97
      %p109 = scmp.eq.s32.totalorder %s24, 1
      %p110 = por %p108, %p109
      %p112 = scmp.ne.s32.totalorder %s97, %s111
      %p113 = scmp.eq.s32.totalorder %s24, 0
      %p114 = por %p112, %p113
      %s116 = sadd.s32 %s115, 1
      %p119 = scmp.eq.s32.totalorder %s18, 1
      %p120 = scmp.ne.s32.totalorder %s115, %s117
      %p121 = scmp.eq.s32.totalorder %s18, 0
      %p122 = por %p120, %p121
      %p123 = scmp.ne.s32.totalorder %s115, %s117
      %p124 = scmp.eq.s32.totalorder %s23, 1
      %p125 = por %p123, %p124
      %p126 = scmp.ne.s32.totalorder %s117, %s118
      %p127 = scmp.eq.s32.totalorder %s23, 0
      %p128 = por %p126, %p127
      %p129 = scmp.ne.s32.totalorder %s117, %s118
      %p130 = scmp.eq.s32.totalorder %s24, 1
      %p131 = por %p129, %p130
      %p133 = scmp.ne.s32.totalorder %s118, %s132
      %p134 = scmp.eq.s32.totalorder %s24, 0
      %p135 = por %p133, %p134
      %s137 = sadd.s32 %s136, 1
      %p140 = scmp.eq.s32.totalorder %s18, 1
      %p141 = scmp.ne.s32.totalorder %s136, %s138
      %p142 = scmp.eq.s32.totalorder %s18, 0
      %p143 = por %p141, %p142
      %p144 = scmp.ne.s32.totalorder %s136, %s138
      %p145 = scmp.eq.s32.totalorder %s23, 1
      %p146 = por %p144, %p145
      %p147 = scmp.ne.s32.totalorder %s138, %s139
      %p148 = scmp.eq.s32.totalorder %s23, 0
      %p149 = por %p147, %p148
      %p150 = scmp.ne.s32.totalorder %s138, %s139
      %p151 = scmp.eq.s32.totalorder %s24, 1
      %p152 = por %p150, %p151
      %p154 = scmp.ne.s32.totalorder %s139, %s153
      %p155 = scmp.eq.s32.totalorder %s24, 0
      %p156 = por %p154, %p155
      %s158 = sadd.s32 %s157, 1
      %p161 = scmp.eq.s32.totalorder %s18, 1
      %p162 = scmp.ne.s32.totalorder %s157, %s159
      %p163 = scmp.eq.s32.totalorder %s18, 0
      %p164 = por %p162, %p163
      %p165 = scmp.ne.s32.totalorder %s157, %s159
      %p166 = scmp.eq.s32.totalorder %s23, 1
      %p167 = por %p165, %p166
      %p168 = scmp.ne.s32.totalorder %s159, %s160
      %p169 = scmp.eq.s32.totalorder %s23, 0
      %p170 = por %p168, %p169
      %p171 = scmp.ne.s32.totalorder %s159, %s160
      %p172 = scmp.eq.s32.totalorder %s24, 1
      %p173 = por %p171, %p172
      %p175 = scmp.ne.s32.totalorder %s160, %s174
      %p176 = scmp.eq.s32.totalorder %s24, 0
      %p177 = por %p175, %p176
      %s179 = sadd.s32 %s178, 1
      %p182 = scmp.eq.s32.totalorder %s18, 1
      %p183 = scmp.ne.s32.totalorder %s178, %s180
      %p184 = scmp.eq.s32.totalorder %s18, 0
      %p185 = por %p183, %p184
      %p186 = scmp.ne.s32.totalorder %s178, %s180
      %p187 = scmp.eq.s32.totalorder %s23, 1
      %p188 = por %p186, %p187
      %p189 = scmp.ne.s32.totalorder %s180, %s181
      %p190 = scmp.eq.s32.totalorder %s23, 0
      %p191 = por %p189, %p190
      %p192 = scmp.ne.s32.totalorder %s180, %s181
      %p193 = scmp.eq.s32.totalorder %s24, 1
      %p194 = por %p192, %p193
      %p196 = scmp.ne.s32.totalorder %s181, %s195
      %p197 = scmp.eq.s32.totalorder %s24, 0
      %p198 = por %p196, %p197
      %s200 = sadd.s32 %s199, 1
      %p203 = scmp.eq.s32.totalorder %s18, 1
      %p204 = scmp.ne.s32.totalorder %s199, %s201
      %p205 = scmp.eq.s32.totalorder %s18, 0
      %p206 = por %p204, %p205
      %p207 = scmp.ne.s32.totalorder %s199, %s201
      %p208 = scmp.eq.s32.totalorder %s23, 1
      %p209 = por %p207, %p208
      %p210 = scmp.ne.s32.totalorder %s201, %s202
      %p211 = scmp.eq.s32.totalorder %s23, 0
      %p212 = por %p210, %p211
      %p213 = scmp.ne.s32.totalorder %s201, %s202
      %p214 = scmp.eq.s32.totalorder %s24, 1
      %p215 = por %p213, %p214
      %p217 = scmp.ne.s32.totalorder %s202, %s216
      %p218 = scmp.eq.s32.totalorder %s24, 0
      %p219 = por %p217, %p218
      %s220 = ssub.s32 %s18, %s25
      %p221 = scmp.eq.s32.totalorder %s220, 0
      %s223 = sadd.s32 %s222, 1
      %s224 = scalar_select %p221, %s222, %s223
      %p227 = pneg %p221
      %p228 = scmp.eq.s32.totalorder %s18, 1
      %p229 = por %p227, %p228
      %p230 = scmp.ne.s32.totalorder %s222, %s225
      %p231 = scmp.eq.s32.totalorder %s18, 0
      %p232 = por %p230, %p231
      %p233 = scmp.ne.s32.totalorder %s222, %s225
      %p234 = scmp.eq.s32.totalorder %s23, 1
      %p235 = por %p233, %p234
      %p236 = scmp.ne.s32.totalorder %s225, %s226
      %p237 = scmp.eq.s32.totalorder %s23, 0
      %p238 = por %p236, %p237
      %p239 = scmp.ne.s32.totalorder %s225, %s226
      %p240 = scmp.eq.s32.totalorder %s24, 1
      %p241 = por %p239, %p240
      %p243 = scmp.ne.s32.totalorder %s226, %s242
      %p244 = scmp.eq.s32.totalorder %s24, 0
      %p245 = por %p243, %p244
      %p246 = scmp.le.s32.totalorder 1, %s18
      %p247 = scmp.lt.s32.totalorder %s18, 3
      %p248 = pnand %p246, %p247
      %p249 = pneg %p248
      // Predicated region
      $region9: #{stacked_ae_forward.1} parent=5 // pred_check
        _
      $region10: #{stacked_ae_forward.1} parent=5 // pred_check_branch
        %251 = sbr.rel (%p248) target = $region12
      $region11: #{stacked_ae_forward.1} parent=5 // pred_region
        %s252 = ssub.s32 %s18, 1
        // Predicated region
        $region13: #{stacked_ae_forward.1} parent=11 // pred_check
          %p253 = pneg %p65
        $region14: #{stacked_ae_forward.1} parent=11 // pred_check_branch
          %255 = sbr.rel (%p253) target = $region16
        $region15: #{stacked_ae_forward.1} parent=11 // pred_region
          _
        $region16: #{stacked_ae_forward.1} parent=11 // pred_fallthru
          _
        // Predicated region
        $region17: #{stacked_ae_forward.1} parent=11 // pred_check
          %p256 = pneg %p86
        $region18: #{stacked_ae_forward.1} parent=11 // pred_check_branch
          %258 = sbr.rel (%p256) target = $region20
        $region19: #{stacked_ae_forward.1} parent=11 // pred_region
          _
        $region20: #{stacked_ae_forward.1} parent=11 // pred_fallthru
          _
        // Predicated region
        $region21: #{stacked_ae_forward.1} parent=11 // pred_check
          %p259 = pneg %p107
        $region22: #{stacked_ae_forward.1} parent=11 // pred_check_branch
          %261 = sbr.rel (%p259) target = $region24
        $region23: #{stacked_ae_forward.1} parent=11 // pred_region
          _
        $region24: #{stacked_ae_forward.1} parent=11 // pred_fallthru
          _
        // Predicated region
        $region25: #{stacked_ae_forward.1} parent=11 // pred_check
          %p262 = pneg %p128
        $region26: #{stacked_ae_forward.1} parent=11 // pred_check_branch
          %264 = sbr.rel (%p262) target = $region28
        $region27: #{stacked_ae_forward.1} parent=11 // pred_region
          _
        $region28: #{stacked_ae_forward.1} parent=11 // pred_fallthru
          _
        // Predicated region
        $region29: #{stacked_ae_forward.1} parent=11 // pred_check
          %p265 = pneg %p149
        $region30: #{stacked_ae_forward.1} parent=11 // pred_check_branch
          %267 = sbr.rel (%p265) target = $region32
        $region31: #{stacked_ae_forward.1} parent=11 // pred_region
          _
        $region32: #{stacked_ae_forward.1} parent=11 // pred_fallthru
          _
        // Predicated region
        $region33: #{stacked_ae_forward.1} parent=11 // pred_check
          %p268 = pneg %p170
        $region34: #{stacked_ae_forward.1} parent=11 // pred_check_branch
          %270 = sbr.rel (%p268) target = $region36
        $region35: #{stacked_ae_forward.1} parent=11 // pred_region
          _
        $region36: #{stacked_ae_forward.1} parent=11 // pred_fallthru
          _
        // Predicated region
        $region37: #{stacked_ae_forward.1} parent=11 // pred_check
          %p271 = pneg %p191
        $region38: #{stacked_ae_forward.1} parent=11 // pred_check_branch
          %273 = sbr.rel (%p271) target = $region40
        $region39: #{stacked_ae_forward.1} parent=11 // pred_region
          _
        $region40: #{stacked_ae_forward.1} parent=11 // pred_fallthru
          _
        // Predicated region
        $region41: #{stacked_ae_forward.1} parent=11 // pred_check
          %p274 = pneg %p212
        $region42: #{stacked_ae_forward.1} parent=11 // pred_check_branch
          %276 = sbr.rel (%p274) target = $region44
        $region43: #{stacked_ae_forward.1} parent=11 // pred_region
          _
        $region44: #{stacked_ae_forward.1} parent=11 // pred_fallthru
          _
      $region12: #{stacked_ae_forward.1} parent=5 // pred_fallthru
        _
      %p277 = scmp.lt.s32.totalorder %s18, 2
      // Predicated region
      $region45: #{stacked_ae_forward.1} parent=5 // pred_check
        %p278 = pneg %p277
      $region46: #{stacked_ae_forward.1} parent=5 // pred_check_branch
        %280 = sbr.rel (%p278) target = $region48
      $region47: #{stacked_ae_forward.1} parent=5 // pred_region
        // Predicated region
        $region49: #{stacked_ae_forward.1} parent=47 // pred_check
          %p281 = pneg %p38
        $region50: #{stacked_ae_forward.1} parent=47 // pred_check_branch
          %283 = sbr.rel (%p281) target = $region52
        $region51: #{stacked_ae_forward.1} parent=47 // pred_region
          %s284 = smul.u32 4, %s18
          %s285 = ssub.s32 7, %s284
          %p286 = scmp.lt.s32.totalorder %s285, 4
          %s287 = scalar_select %p286, %s285, 4
          %s288 = smul.u32 128, %s287
          %s289 = smul.u32 %s288, 2
          %p290 = scmp.lt.s32.totalorder %s284, 6
          %s291 = scalar_select %p290, %s284, 6
          %s292 = smul.addr %s291, 2
          %s293 = smul.addr %s292, 8
          %s294 = scalar_lea.vmem %s0, %s293
          %s295 = smul.u32 4, %s18
          %s296 = ssub.s32 7, %s295
          %p297 = scmp.lt.s32.totalorder %s296, 4
          %s298 = scalar_select %p297, %s296, 4
          %s299 = smul.u32 128, %s298
          %s300 = smul.u32 %s299, 2
        $region52: #{stacked_ae_forward.1} parent=47 // pred_fallthru
          _
      $region48: #{stacked_ae_forward.1} parent=5 // pred_fallthru
        _
      %p301 = scmp.le.s32.totalorder 1, %s18
      %p302 = scmp.lt.s32.totalorder %s18, 3
      %p303 = pnand %p301, %p302
      %p304 = pneg %p303
      // Predicated region
      $region53: #{stacked_ae_forward.1} parent=5 // pred_check
        _
      $region54: #{stacked_ae_forward.1} parent=5 // pred_check_branch
        %306 = sbr.rel (%p303) target = $region56
      $region55: #{stacked_ae_forward.1} parent=5 // pred_region
        %s307 = ssub.s32 %s18, 1
        %s308 = smul.u32 4, %s23
        %s309 = ssub.s32 7, %s308
        %p310 = scmp.lt.s32.totalorder %s309, 4
        %s311 = scalar_select %p310, %s309, 4
        %s312 = smul.u32 128, %s311
        %s313 = smul.u32 %s312, 2
        %p314 = scmp.lt.s32.totalorder %s308, 6
        %s315 = scalar_select %p314, %s308, 6
        %s316 = smul.addr %s315, 2
        %s317 = smul.addr %s316, 8
        %s318 = scalar_lea.vmem %s0, %s317
        %p319 = pneg %p44
        %p320 = pneg %p41
        %p321 = pneg %p65
        %p322 = pneg %p62
        %p323 = pneg %p86
        %p324 = pneg %p83
        %p325 = pneg %p107
        %p326 = pneg %p104
        %p327 = pneg %p128
        %p328 = pneg %p125
        %p329 = pneg %p149
        %p330 = pneg %p146
        %p331 = pneg %p170
        %p332 = pneg %p167
        %p333 = pneg %p191
        %p334 = pneg %p188
        %p335 = pneg %p212
        %p336 = pneg %p209
        %p337 = pneg %p238
        %p338 = pneg %p235
        %s339 = sand.u32 %s225, 1
        %s340 = scalar_lea.sflag [#allocation3], %s339
        %s341 = sand.u32 %s225, 1
        %s342 = smul.addr %s341, 64
        %s343 = scalar_lea.vmem [#allocation2], %s342
        %s344 = smul.u32 4, %s23
        %s345 = ssub.s32 7, %s344
        %p346 = scmp.lt.s32.totalorder %s345, 4
        %s347 = scalar_select %p346, %s345, 4
        %s348 = smul.u32 128, %s347
        %s349 = smul.u32 %s348, 2
        %p350 = scmp.lt.s32.totalorder %s344, 6
        %s351 = scalar_select %p350, %s344, 6
        %s352 = smul.addr %s351, 2
        %s353 = smul.addr %s352, 8
        %s354 = scalar_lea.vmem %s0, %s353
        %s355 = smul.u32 4, %s23
        %s356 = ssub.s32 7, %s355
        %p357 = scmp.lt.s32.totalorder %s356, 4
        %s358 = scalar_select %p357, %s356, 4
        %s359 = smul.u32 128, %s358
        %s360 = smul.u32 %s359, 2
        %s361 = smul.u32 4, %s23
        %s362 = ssub.s32 7, %s361
        %p363 = scmp.lt.s32.totalorder %s362, 4
        %s364 = scalar_select %p363, %s362, 4
        %s365 = smul.u32 128, %s364
        %s366 = smul.u32 %s365, 2
        %v368 = vld [vmem:[%s354] sm:$0xff]
        %v369 = vld [vmem:[%s354 + $0x8] sm:$0xff]
        %v370 = vld [vmem:[%s354 + $0x10] sm:$0xff]
        %v371 = vld [vmem:[%s354 + $0x18] sm:$0xff]
        %v372 = vld [vmem:[%s354 + $0x20] sm:$0xff]
        %v373 = vld [vmem:[%s354 + $0x28] sm:$0xff]
        %v374 = vld [vmem:[%s354 + $0x30] sm:$0xff]
        %v375 = vld [vmem:[%s354 + $0x38] sm:$0xff]
        %v376 = vpack.c.bf16 %v370, %v368
        %v377 = vpack.c.bf16 %v371, %v369
        %v378 = vpack.c.bf16 %v374, %v372
        %v379 = vpack.c.bf16 %v375, %v373
        %v380 = vld [vmem:[%s1] sm:$0xf]
        %v381 = vld [vmem:[%s1 + $0x4] sm:$0xf]
        %v382 = vld [vmem:[%s1 + $0x8] sm:$0xf]
        %v383 = vld [vmem:[%s1 + $0xc] sm:$0xf]
        %v384 = vld [vmem:[%s1 + $0x10] sm:$0xf]
        %v385 = vld [vmem:[%s1 + $0x14] sm:$0xf]
        %v386 = vld [vmem:[%s1 + $0x18] sm:$0xf]
        %v387 = vld [vmem:[%s1 + $0x1c] sm:$0xf]
        %v388 = vld [vmem:[%s1 + $0x20] sm:$0xf]
        %v389 = vld [vmem:[%s1 + $0x24] sm:$0xf]
        %v390 = vld [vmem:[%s1 + $0x28] sm:$0xf]
        %v391 = vld [vmem:[%s1 + $0x2c] sm:$0xf]
        %v392 = vld [vmem:[%s1 + $0x30] sm:$0xf]
        %v393 = vld [vmem:[%s1 + $0x34] sm:$0xf]
        %v394 = vld [vmem:[%s1 + $0x38] sm:$0xf]
        %v395 = vld [vmem:[%s1 + $0x3c] sm:$0xf]
        %v396 = vld [vmem:[%s1 + $0x40] sm:$0xf]
        %v397 = vld [vmem:[%s1 + $0x44] sm:$0xf]
        %v398 = vld [vmem:[%s1 + $0x48] sm:$0xf]
        %v399 = vld [vmem:[%s1 + $0x4c] sm:$0xf]
        %v400 = vld [vmem:[%s1 + $0x50] sm:$0xf]
        %v401 = vld [vmem:[%s1 + $0x54] sm:$0xf]
        %v402 = vld [vmem:[%s1 + $0x58] sm:$0xf]
        %v403 = vld [vmem:[%s1 + $0x5c] sm:$0xf]
        %v404 = vld [vmem:[%s1 + $0x60] sm:$0xf]
        %v405 = vld [vmem:[%s2] sm:$0x1]
        %v407 = vlaneseq
        %v408 = vshrl.u32 %v407, 7
        %v409 = vsub.s32 0, %v408
        %v410 = vrot.slane %v405, %v409
        %v437 = vunpack.c.l.b16 %v380
        %v438 = vunpack.c.l.b16 %v381
        %v439 = vunpack.c.l.b16 %v382
        %v440 = vunpack.c.l.b16 %v383
        %v441 = vunpack.c.l.b16 %v384
        %v442 = vunpack.c.l.b16 %v385
        %v443 = vunpack.c.l.b16 %v386
        %v444 = vunpack.c.l.b16 %v387
        %v445 = vunpack.c.l.b16 %v388
        %v446 = vunpack.c.l.b16 %v389
        %v447 = vunpack.c.l.b16 %v390
        %v448 = vunpack.c.l.b16 %v391
        %v449 = vunpack.c.l.b16 %v392
        %v450 = vunpack.c.l.b16 %v393
        %v451 = vunpack.c.l.b16 %v394
        %v452 = vunpack.c.l.b16 %v395
        %v453 = vunpack.c.l.b16 %v396
        %v454 = vunpack.c.l.b16 %v397
        %v455 = vunpack.c.l.b16 %v398
        %v456 = vunpack.c.l.b16 %v399
        %v457 = vunpack.c.l.b16 %v400
        %v458 = vunpack.c.l.b16 %v401
        %v459 = vunpack.c.l.b16 %v402
        %v460 = vunpack.c.l.b16 %v403
        %v461 = vunpack.c.l.b16 %v404
        %v462 = vpack.c.b16 %v438, %v437
        %v463 = vpack.c.b16 %v440, %v439
        %v464 = vpack.c.b16 %v442, %v441
        %v465 = vpack.c.b16 %v444, %v443
        %v466 = vpack.c.b16 %v446, %v445
        %v467 = vpack.c.b16 %v448, %v447
        %v468 = vpack.c.b16 %v450, %v449
        %v469 = vpack.c.b16 %v452, %v451
        %v470 = vpack.c.b16 %v454, %v453
        %v471 = vpack.c.b16 %v456, %v455
        %v472 = vpack.c.b16 %v458, %v457
        %v473 = vpack.c.b16 %v460, %v459
        %v474 = vpack.c.b16 %v461, %v461
        %vm487 = vcmask 588800
        %v489 = vsel %vm487, %v377, 0
        %v492 = vsel %vm487, %v379, 0
        %vm494 = vcmask 1043456
        %v496 = vsel %vm494, %v474, 0
        %498 = vmatprep.subr.bf16.mxu0 0
        %499 = vmatpush1.bf16.msra.mxu0 %v462
        %500 = vmatprep.subr.bf16.mxu0 0
        %501 = vmatpush1.bf16.msra.mxu0 %v463
        %502 = vmatprep.subr.bf16.mxu0 0
        %503 = vmatpush1.bf16.msra.mxu0 %v464
        %504 = vmatprep.subr.bf16.mxu0 0
        %505 = vmatpush1.bf16.msra.mxu0 %v465
        %506 = vmatprep.subr.bf16.mxu0 0
        %507 = vmatpush1.bf16.msra.mxu0 %v466
        %508 = vmatprep.subr.bf16.mxu0 0
        %509 = vmatpush1.bf16.msra.mxu0 %v467
        %510 = vmatprep.subr.bf16.mxu0 0
        %511 = vmatpush1.bf16.msra.mxu0 %v468
        %512 = vmatprep.subr.bf16.mxu0 0
        %513 = vmatpush1.bf16.msra.mxu0 %v469
        %514 = vmatprep.subr.bf16.mxu0 0
        %515 = vmatpush1.bf16.msra.mxu0 %v470
        %516 = vmatprep.subr.bf16.mxu0 0
        %517 = vmatpush1.bf16.msra.mxu0 %v471
        %518 = vmatprep.subr.bf16.mxu0 0
        %519 = vmatpush1.bf16.msra.mxu0 %v472
        %520 = vmatprep.subr.bf16.mxu0 0
        %521 = vmatpush1.bf16.msra.mxu0 %v473
        %522 = vmatprep.subr.bf16.mxu0 0
        %523 = vmatpush1.bf16.msra.mxu0 %v496
        %524 = vmatprep.subr.bf16.mxu0 0
        %525 = vmatpush1.bf16.msra.mxu0 0
        %526 = vmatprep.subr.bf16.mxu0 0
        %527 = vmatpush1.bf16.msra.mxu0 0
        %528 = vmatprep.subr.bf16.mxu0 0
        %529 = vmatpush1.bf16.msra.mxu0 0
        %530 = vmatprep.mubr.bf16.mxu0 %v489
        %531 = vmatmul.mubr.bf16.gmra.mrb[0].mxu0 %v376
        %v532 = vpop.f32.mrb[0].mxu0
        %v533 = vadd.f32 %v410, %v532
        %v534 = vpop.f32.mrb[0].mxu0
        %v535 = vpop.f32.mrb[0].mxu0
        %v536 = vadd.f32 %v410, %v535
        %v537 = vpop.f32.mrb[0].mxu0
        %538 = vmatprep.mubr.bf16.mxu0 %v492
        %539 = vmatmul.mubr.bf16.gmra.mrb[0].mxu0 %v378
        %v540 = vpop.f32.mrb[0].mxu0
        %v541 = vadd.f32 %v410, %v540
        %v542 = vpop.f32.mrb[0].mxu0
        %v543 = vpop.f32.mrb[0].mxu0
        %v544 = vadd.f32 %v410, %v543
        %v545 = vpop.f32.mrb[0].mxu0
        %546 = vdwg.mxu0
        %v547 = vmul.f32 %v533, 0.5
        %v548 = vmul.f32 %v536, 0.5
        %v549 = vmul.f32 %v541, 0.5
        %v550 = vmul.f32 %v544, 0.5
        %v551 = vtanh.pop %v547
        %v552 = vtanh.pop %v548
        %v553 = vtanh.pop %v549
        %v554 = vtanh.pop %v550
        %v555 = vadd.f32 %v551, 1.0
        %v556 = vadd.f32 %v552, 1.0
        %v557 = vadd.f32 %v553, 1.0
        %v558 = vadd.f32 %v554, 1.0
        %v559 = vmul.f32 %v555, 0.5
        %v560 = vmul.f32 %v556, 0.5
        %v561 = vmul.f32 %v557, 0.5
        %v562 = vmul.f32 %v558, 0.5
        %v563 = vpack.c.bf16 %v560, %v559
        %v564 = vpack.c.bf16 %v562, %v561
        %v565 = vld [vmem:[%s3] sm:$0xf]
        %v566 = vld [vmem:[%s3 + $0x4] sm:$0xf]
        %v567 = vld [vmem:[%s3 + $0x8] sm:$0xf]
        %v568 = vld [vmem:[%s3 + $0xc] sm:$0xf]
        %v569 = vld [vmem:[%s3 + $0x10] sm:$0xf]
        %v570 = vld [vmem:[%s3 + $0x14] sm:$0xf]
        %v571 = vld [vmem:[%s3 + $0x18] sm:$0xf]
        %v572 = vld [vmem:[%s3 + $0x1c] sm:$0xf]
        %v573 = vld [vmem:[%s3 + $0x20] sm:$0xf]
        %v574 = vld [vmem:[%s3 + $0x24] sm:$0xf]
        %v575 = vld [vmem:[%s3 + $0x28] sm:$0xf]
        %v576 = vld [vmem:[%s3 + $0x2c] sm:$0xf]
        %v577 = vld [vmem:[%s3 + $0x30] sm:$0xf]
        %v578 = vld [vmem:[%s3 + $0x34] sm:$0xf]
        %v579 = vld [vmem:[%s3 + $0x38] sm:$0xf]
        %v580 = vld [vmem:[%s3 + $0x3c] sm:$0xf]
        %v581 = vld [vmem:[%s4] sm:$0x1]
        %v583 = vlaneseq
        %v584 = vshrl.u32 %v583, 7
        %v585 = vsub.s32 0, %v584
        %v586 = vrot.slane %v581, %v585
        %v604 = vunpack.c.l.b16 %v565
        %v605 = vunpack.c.l.b16 %v566
        %v606 = vunpack.c.l.b16 %v567
        %v607 = vunpack.c.l.b16 %v568
        %v608 = vunpack.c.l.b16 %v569
        %v609 = vunpack.c.l.b16 %v570
        %v610 = vunpack.c.l.b16 %v571
        %v611 = vunpack.c.l.b16 %v572
        %v612 = vunpack.c.l.b16 %v573
        %v613 = vunpack.c.l.b16 %v574
        %v614 = vunpack.c.l.b16 %v575
        %v615 = vunpack.c.l.b16 %v576
        %v616 = vunpack.c.l.b16 %v577
        %v617 = vunpack.c.l.b16 %v578
        %v618 = vunpack.c.l.b16 %v579
        %v619 = vunpack.c.l.b16 %v580
        %v620 = vpack.c.b16 %v605, %v604
        %v621 = vpack.c.b16 %v607, %v606
        %v622 = vpack.c.b16 %v609, %v608
        %v623 = vpack.c.b16 %v611, %v610
        %v624 = vpack.c.b16 %v613, %v612
        %v625 = vpack.c.b16 %v615, %v614
        %v626 = vpack.c.b16 %v617, %v616
        %v627 = vpack.c.b16 %v619, %v618
        %636 = vmatprep.subr.bf16.mxu0 0
        %637 = vmatpush1.bf16.msra.mxu0 %v620
        %638 = vmatprep.subr.bf16.mxu0 0
        %639 = vmatpush1.bf16.msra.mxu0 %v621
        %640 = vmatprep.subr.bf16.mxu0 0
        %641 = vmatpush1.bf16.msra.mxu0 %v622
        %642 = vmatprep.subr.bf16.mxu0 0
        %643 = vmatpush1.bf16.msra.mxu0 %v623
        %644 = vmatprep.subr.bf16.mxu0 0
        %645 = vmatpush1.bf16.msra.mxu0 %v624
        %646 = vmatprep.subr.bf16.mxu0 0
        %647 = vmatpush1.bf16.msra.mxu0 %v625
        %648 = vmatprep.subr.bf16.mxu0 0
        %649 = vmatpush1.bf16.msra.mxu0 %v626
        %650 = vmatprep.subr.bf16.mxu0 0
        %651 = vmatpush1.bf16.msra.mxu0 %v627
        %652 = vmatprep.subr.bf16.mxu0 0
        %653 = vmatpush1.bf16.msra.mxu0 0
        %654 = vmatprep.subr.bf16.mxu0 0
        %655 = vmatpush1.bf16.msra.mxu0 0
        %656 = vmatprep.subr.bf16.mxu0 0
        %657 = vmatpush1.bf16.msra.mxu0 0
        %658 = vmatprep.subr.bf16.mxu0 0
        %659 = vmatpush1.bf16.msra.mxu0 0
        %660 = vmatprep.subr.bf16.mxu0 0
        %661 = vmatpush1.bf16.msra.mxu0 0
        %662 = vmatprep.subr.bf16.mxu0 0
        %663 = vmatpush1.bf16.msra.mxu0 0
        %664 = vmatprep.subr.bf16.mxu0 0
        %665 = vmatpush1.bf16.msra.mxu0 0
        %666 = vmatprep.subr.bf16.mxu0 0
        %667 = vmatpush1.bf16.msra.mxu0 0
        %668 = vmatprep.mubr.bf16.mxu0 0
        %669 = vmatmul.mubr.bf16.gmra.mrb[0].mxu0 %v563
        %v670 = vpop.f32.mrb[0].mxu0
        %v671 = vadd.f32 %v586, %v670
        %v672 = vpop.f32.mrb[0].mxu0
        %v673 = vpop.f32.mrb[0].mxu0
        %v674 = vadd.f32 %v586, %v673
        %v675 = vpop.f32.mrb[0].mxu0
        %676 = vmatprep.mubr.bf16.mxu0 0
        %677 = vmatmul.mubr.bf16.gmra.mrb[0].mxu0 %v564
        %v678 = vpop.f32.mrb[0].mxu0
        %v679 = vadd.f32 %v586, %v678
        %v680 = vpop.f32.mrb[0].mxu0
        %v681 = vpop.f32.mrb[0].mxu0
        %v682 = vadd.f32 %v586, %v681
        %v683 = vpop.f32.mrb[0].mxu0
        %684 = vdwg.mxu0
        %v685 = vmul.f32 %v671, 0.5
        %v686 = vmul.f32 %v674, 0.5
        %v687 = vmul.f32 %v679, 0.5
        %v688 = vmul.f32 %v682, 0.5
        %v689 = vtanh.pop %v685
        %v690 = vtanh.pop %v686
        %v691 = vtanh.pop %v687
        %v692 = vtanh.pop %v688
        %v693 = vadd.f32 %v689, 1.0
        %v694 = vadd.f32 %v690, 1.0
        %v695 = vadd.f32 %v691, 1.0
        %v696 = vadd.f32 %v692, 1.0
        %v697 = vmul.f32 %v693, 0.5
        %v698 = vmul.f32 %v694, 0.5
        %v699 = vmul.f32 %v695, 0.5
        %v700 = vmul.f32 %v696, 0.5
        %v701 = vpack.c.bf16 %v698, %v697
        %v702 = vpack.c.bf16 %v700, %v699
        %v703 = vld [vmem:[%s5] sm:$0xf]
        %v704 = vld [vmem:[%s5 + $0x4] sm:$0xf]
        %v705 = vld [vmem:[%s5 + $0x8] sm:$0xf]
        %v706 = vld [vmem:[%s5 + $0xc] sm:$0xf]
        %v707 = vld [vmem:[%s5 + $0x10] sm:$0xf]
        %v708 = vld [vmem:[%s5 + $0x14] sm:$0xf]
        %v709 = vld [vmem:[%s5 + $0x18] sm:$0xf]
        %v710 = vld [vmem:[%s5 + $0x1c] sm:$0xf]
        %v711 = vld [vmem:[%s5 + $0x20] sm:$0xf]
        %v712 = vld [vmem:[%s5 + $0x24] sm:$0xf]
        %v713 = vld [vmem:[%s5 + $0x28] sm:$0xf]
        %v714 = vld [vmem:[%s5 + $0x2c] sm:$0xf]
        %v715 = vld [vmem:[%s5 + $0x30] sm:$0xf]
        %v716 = vld [vmem:[%s5 + $0x34] sm:$0xf]
        %v717 = vld [vmem:[%s5 + $0x38] sm:$0xf]
        %v718 = vld [vmem:[%s5 + $0x3c] sm:$0xf]
        %v719 = vld [vmem:[%s6] sm:$0x1]
        %v721 = vlaneseq
        %v722 = vshrl.u32 %v721, 7
        %v723 = vsub.s32 0, %v722
        %v724 = vrot.slane %v719, %v723
        %v742 = vunpack.c.l.b16 %v703
        %v743 = vunpack.c.l.b16 %v704
        %v744 = vunpack.c.l.b16 %v705
        %v745 = vunpack.c.l.b16 %v706
        %v746 = vunpack.c.l.b16 %v707
        %v747 = vunpack.c.l.b16 %v708
        %v748 = vunpack.c.l.b16 %v709
        %v749 = vunpack.c.l.b16 %v710
        %v750 = vunpack.c.l.b16 %v711
        %v751 = vunpack.c.l.b16 %v712
        %v752 = vunpack.c.l.b16 %v713
        %v753 = vunpack.c.l.b16 %v714
        %v754 = vunpack.c.l.b16 %v715
        %v755 = vunpack.c.l.b16 %v716
        %v756 = vunpack.c.l.b16 %v717
        %v757 = vunpack.c.l.b16 %v718
        %v758 = vpack.c.b16 %v743, %v742
        %v759 = vpack.c.b16 %v745, %v744
        %v760 = vpack.c.b16 %v747, %v746
        %v761 = vpack.c.b16 %v749, %v748
        %v762 = vpack.c.b16 %v751, %v750
        %v763 = vpack.c.b16 %v753, %v752
        %v764 = vpack.c.b16 %v755, %v754
        %v765 = vpack.c.b16 %v757, %v756
        %774 = vmatprep.subr.bf16.mxu0 0
        %775 = vmatpush1.bf16.msra.mxu0 %v758
        %776 = vmatprep.subr.bf16.mxu0 0
        %777 = vmatpush1.bf16.msra.mxu0 %v759
        %778 = vmatprep.subr.bf16.mxu0 0
        %779 = vmatpush1.bf16.msra.mxu0 %v760
        %780 = vmatprep.subr.bf16.mxu0 0
        %781 = vmatpush1.bf16.msra.mxu0 %v761
        %782 = vmatprep.subr.bf16.mxu0 0
        %783 = vmatpush1.bf16.msra.mxu0 %v762
        %784 = vmatprep.subr.bf16.mxu0 0
        %785 = vmatpush1.bf16.msra.mxu0 %v763
        %786 = vmatprep.subr.bf16.mxu0 0
        %787 = vmatpush1.bf16.msra.mxu0 %v764
        %788 = vmatprep.subr.bf16.mxu0 0
        %789 = vmatpush1.bf16.msra.mxu0 %v765
        %790 = vmatprep.subr.bf16.mxu0 0
        %791 = vmatpush1.bf16.msra.mxu0 0
        %792 = vmatprep.subr.bf16.mxu0 0
        %793 = vmatpush1.bf16.msra.mxu0 0
        %794 = vmatprep.subr.bf16.mxu0 0
        %795 = vmatpush1.bf16.msra.mxu0 0
        %796 = vmatprep.subr.bf16.mxu0 0
        %797 = vmatpush1.bf16.msra.mxu0 0
        %798 = vmatprep.subr.bf16.mxu0 0
        %799 = vmatpush1.bf16.msra.mxu0 0
        %800 = vmatprep.subr.bf16.mxu0 0
        %801 = vmatpush1.bf16.msra.mxu0 0
        %802 = vmatprep.subr.bf16.mxu0 0
        %803 = vmatpush1.bf16.msra.mxu0 0
        %804 = vmatprep.subr.bf16.mxu0 0
        %805 = vmatpush1.bf16.msra.mxu0 0
        %806 = vmatprep.mubr.bf16.mxu0 0
        %807 = vmatmul.mubr.bf16.gmra.mrb[0].mxu0 %v701
        %v808 = vpop.f32.mrb[0].mxu0
        %v809 = vadd.f32 %v724, %v808
        %v810 = vpop.f32.mrb[0].mxu0
        %v811 = vpop.f32.mrb[0].mxu0
        %v812 = vadd.f32 %v724, %v811
        %v813 = vpop.f32.mrb[0].mxu0
        %814 = vmatprep.mubr.bf16.mxu0 0
        %815 = vmatmul.mubr.bf16.gmra.mrb[0].mxu0 %v702
        %v816 = vpop.f32.mrb[0].mxu0
        %v817 = vadd.f32 %v724, %v816
        %v818 = vpop.f32.mrb[0].mxu0
        %v819 = vpop.f32.mrb[0].mxu0
        %v820 = vadd.f32 %v724, %v819
        %v821 = vpop.f32.mrb[0].mxu0
        %822 = vdwg.mxu0
        %v823 = vmul.f32 %v809, 0.5
        %v824 = vmul.f32 %v812, 0.5
        %v825 = vmul.f32 %v817, 0.5
        %v826 = vmul.f32 %v820, 0.5
        %v827 = vtanh.pop %v823
        %v828 = vtanh.pop %v824
        %v829 = vtanh.pop %v825
        %v830 = vtanh.pop %v826
        %v831 = vadd.f32 %v827, 1.0
        %v832 = vadd.f32 %v828, 1.0
        %v833 = vadd.f32 %v829, 1.0
        %v834 = vadd.f32 %v830, 1.0
        %v835 = vmul.f32 %v831, 0.5
        %v836 = vmul.f32 %v832, 0.5
        %v837 = vmul.f32 %v833, 0.5
        %v838 = vmul.f32 %v834, 0.5
        %v839 = vpack.c.bf16 %v836, %v835
        %v840 = vpack.c.bf16 %v838, %v837
        %v841 = vld [vmem:[%s7] sm:$0xff]
        %v842 = vld [vmem:[%s7 + $0x8] sm:$0xff]
        %v843 = vld [vmem:[%s7 + $0x10] sm:$0xff]
        %v844 = vld [vmem:[%s7 + $0x18] sm:$0xff]
        %v845 = vld [vmem:[%s7 + $0x20] sm:$0xff]
        %v846 = vld [vmem:[%s7 + $0x28] sm:$0xff]
        %v847 = vld [vmem:[%s7 + $0x30] sm:$0xff]
        %v848 = vld [vmem:[%s7 + $0x38] sm:$0xff]
        %v849 = vld [vmem:[%s7 + $0x40] sm:$0xff]
        %v850 = vld [vmem:[%s7 + $0x48] sm:$0xff]
        %v851 = vld [vmem:[%s7 + $0x50] sm:$0xff]
        %v852 = vld [vmem:[%s7 + $0x58] sm:$0xff]
        %v853 = vld [vmem:[%s7 + $0x60] sm:$0xff]
        %v854 = vld [vmem:[%s7 + $0x68] sm:$0xff]
        %v855 = vld [vmem:[%s7 + $0x70] sm:$0xff]
        %v856 = vld [vmem:[%s7 + $0x78] sm:$0xff]
        %v857 = vld [vmem:[%s8] sm:$0x3]
        %v859 = vlaneseq
        %v860 = vshrl.u32 %v859, 7
        %v861 = vsub.s32 0, %v860
        %v862 = vrot.slane %v857, %v861
        %v863 = vlaneseq
        %v864 = vshrl.u32 %v863, 7
        %v865 = vsub.s32 1, %v864
        %v866 = vrot.slane %v857, %v865
        %v885 = vunpack.c.l.b16 %v841
        %v886 = vunpack.c.h.b16 %v841
        %v887 = vunpack.c.l.b16 %v842
        %v888 = vunpack.c.h.b16 %v842
        %v889 = vunpack.c.l.b16 %v843
        %v890 = vunpack.c.h.b16 %v843
        %v891 = vunpack.c.l.b16 %v844
        %v892 = vunpack.c.h.b16 %v844
        %v893 = vunpack.c.l.b16 %v845
        %v894 = vunpack.c.h.b16 %v845
        %v895 = vunpack.c.l.b16 %v846
        %v896 = vunpack.c.h.b16 %v846
        %v897 = vunpack.c.l.b16 %v847
        %v898 = vunpack.c.h.b16 %v847
        %v899 = vunpack.c.l.b16 %v848
        %v900 = vunpack.c.h.b16 %v848
        %v901 = vunpack.c.l.b16 %v849
        %v902 = vunpack.c.h.b16 %v849
        %v903 = vunpack.c.l.b16 %v850
        %v904 = vunpack.c.h.b16 %v850
        %v905 = vunpack.c.l.b16 %v851
        %v906 = vunpack.c.h.b16 %v851
        %v907 = vunpack.c.l.b16 %v852
        %v908 = vunpack.c.h.b16 %v852
        %v909 = vunpack.c.l.b16 %v853
        %v910 = vunpack.c.h.b16 %v853
        %v911 = vunpack.c.l.b16 %v854
        %v912 = vunpack.c.h.b16 %v854
        %v913 = vunpack.c.l.b16 %v855
        %v914 = vunpack.c.h.b16 %v855
        %v915 = vunpack.c.l.b16 %v856
        %v916 = vunpack.c.h.b16 %v856
        %v917 = vpack.c.b16 %v887, %v885
        %v918 = vpack.c.b16 %v888, %v886
        %v919 = vpack.c.b16 %v891, %v889
        %v920 = vpack.c.b16 %v892, %v890
        %v921 = vpack.c.b16 %v895, %v893
        %v922 = vpack.c.b16 %v896, %v894
        %v923 = vpack.c.b16 %v899, %v897
        %v924 = vpack.c.b16 %v900, %v898
        %v925 = vpack.c.b16 %v903, %v901
        %v926 = vpack.c.b16 %v904, %v902
        %v927 = vpack.c.b16 %v907, %v905
        %v928 = vpack.c.b16 %v908, %v906
        %v929 = vpack.c.b16 %v911, %v909
        %v930 = vpack.c.b16 %v912, %v910
        %v931 = vpack.c.b16 %v915, %v913
        %v932 = vpack.c.b16 %v916, %v914
        %949 = vmatprep.subr.bf16.mxu0 %v918
        %950 = vmatpush1.bf16.msra.mxu0 %v917
        %951 = vmatprep.subr.bf16.mxu0 %v920
        %952 = vmatpush1.bf16.msra.mxu0 %v919
        %953 = vmatprep.subr.bf16.mxu0 %v922
        %954 = vmatpush1.bf16.msra.mxu0 %v921
        %955 = vmatprep.subr.bf16.mxu0 %v924
        %956 = vmatpush1.bf16.msra.mxu0 %v923
        %957 = vmatprep.subr.bf16.mxu0 %v926
        %958 = vmatpush1.bf16.msra.mxu0 %v925
        %959 = vmatprep.subr.bf16.mxu0 %v928
        %960 = vmatpush1.bf16.msra.mxu0 %v927
        %961 = vmatprep.subr.bf16.mxu0 %v930
        %962 = vmatpush1.bf16.msra.mxu0 %v929
        %963 = vmatprep.subr.bf16.mxu0 %v932
        %964 = vmatpush1.bf16.msra.mxu0 %v931
        %965 = vmatprep.subr.bf16.mxu0 0
        %966 = vmatpush1.bf16.msra.mxu0 0
        %967 = vmatprep.subr.bf16.mxu0 0
        %968 = vmatpush1.bf16.msra.mxu0 0
        %969 = vmatprep.subr.bf16.mxu0 0
        %970 = vmatpush1.bf16.msra.mxu0 0
        %971 = vmatprep.subr.bf16.mxu0 0
        %972 = vmatpush1.bf16.msra.mxu0 0
        %973 = vmatprep.subr.bf16.mxu0 0
        %974 = vmatpush1.bf16.msra.mxu0 0
        %975 = vmatprep.subr.bf16.mxu0 0
        %976 = vmatpush1.bf16.msra.mxu0 0
        %977 = vmatprep.subr.bf16.mxu0 0
        %978 = vmatpush1.bf16.msra.mxu0 0
        %979 = vmatprep.subr.bf16.mxu0 0
        %980 = vmatpush1.bf16.msra.mxu0 0
        %981 = vmatprep.mubr.bf16.mxu0 0
        %982 = vmatmul.mubr.bf16.gmra.mrb[0].mxu0 %v839
        %v983 = vpop.f32.mrb[0].mxu0
        %v984 = vadd.f32 %v862, %v983
        %v985 = vpop.f32.mrb[0].mxu0
        %v986 = vadd.f32 %v866, %v985
        %v987 = vpop.f32.mrb[0].mxu0
        %v988 = vadd.f32 %v862, %v987
        %v989 = vpop.f32.mrb[0].mxu0
        %v990 = vadd.f32 %v866, %v989
        %991 = vmatprep.mubr.bf16.mxu0 0
        %992 = vmatmul.mubr.bf16.gmra.mrb[0].mxu0 %v840
        %v993 = vpop.f32.mrb[0].mxu0
        %v994 = vadd.f32 %v862, %v993
        %v995 = vpop.f32.mrb[0].mxu0
        %v996 = vadd.f32 %v866, %v995
        %v997 = vpop.f32.mrb[0].mxu0
        %v998 = vadd.f32 %v862, %v997
        %v999 = vpop.f32.mrb[0].mxu0
        %v1000 = vadd.f32 %v866, %v999
        %1001 = vdwg.mxu0
        %1002 = vst [vmem:[%s343] sm:$0xff] %v984
        %1003 = vst.msk [vmem:[%s343 + $0x8] sm:$0xff] %vm487, %v986
        %1004 = vst [vmem:[%s343 + $0x10] sm:$0xff] %v988
        %1005 = vst.msk [vmem:[%s343 + $0x18] sm:$0xff] %vm487, %v990
        %1006 = vst [vmem:[%s343 + $0x20] sm:$0xff] %v994
        %1007 = vst.msk [vmem:[%s343 + $0x28] sm:$0xff] %vm487, %v996
        %1008 = vst [vmem:[%s343 + $0x30] sm:$0xff] %v998
        %1009 = vst.msk [vmem:[%s343 + $0x38] sm:$0xff] %vm487, %v1000
        %s1010 = sand.u32 %s225, 1
        %s1011 = scalar_lea.sflag [#allocation3], %s1010
        %s1012 = sand.u32 %s225, 1
        %s1013 = smul.addr %s1012, 64
        %s1014 = scalar_lea.vmem [#allocation2], %s1013
        // Predicated region
        $region57: #{stacked_ae_forward.1} parent=55 // pred_check
          %p1015 = pneg %p235
        $region58: #{stacked_ae_forward.1} parent=55 // pred_check_branch
          %1017 = sbr.rel (%p1015) target = $region60
        $region59: #{stacked_ae_forward.1} parent=55 // pred_region
          %s1018 = smul.u32 4, %s23
          %s1019 = ssub.s32 7, %s1018
          %p1020 = scmp.lt.s32.totalorder %s1019, 4
          %s1021 = scalar_select %p1020, %s1019, 4
          %s1022 = smul.u32 128, %s1021
          %s1023 = smul.u32 %s1022, 2
          %s1025 = ssub.s32 1024, %s1023
          %1026 = vsyncadd %s1011, %s1025
          %p1027 = scmp.ne.s32.totalorder 0, %s1023
          %s1028 = smul.addr %s1018, 2
          %s1029 = smul.addr %s1028, 128
          %s1030 = scalar_lea.hbm %s9, %s1029
          %s1031 = smul.u32 16, %s1021
          %s1032 = sshll.u32 %s1014, 4
          %s1033 = int_to_ptr.vmem [resolvable:$true] %s1032
          %s1034 = sshll.u32 %s1031, 4
          %1038 = dma.vmem_to_hbm [thread:$0]  (%p1027), %s1033, %s1034, %s1030, %s1011, 256, 256, 16
        $region60: #{stacked_ae_forward.1} parent=55 // pred_fallthru
          _
      $region56: #{stacked_ae_forward.1} parent=5 // pred_fallthru
        _
      %p1039 = scmp.le.s32.totalorder 2, %s18
      // Predicated region
      $region61: #{stacked_ae_forward.1} parent=5 // pred_check
        %p1040 = pneg %p1039
      $region62: #{stacked_ae_forward.1} parent=5 // pred_check_branch
        %1042 = sbr.rel (%p1040) target = $region64
      $region63: #{stacked_ae_forward.1} parent=5 // pred_region
        %s1043 = ssub.s32 %s18, 2
        // Predicated region
        $region65: #{stacked_ae_forward.1} parent=63 // pred_check
          %p1044 = pneg %p241
        $region66: #{stacked_ae_forward.1} parent=63 // pred_check_branch
          %1046 = sbr.rel (%p1044) target = $region68
        $region67: #{stacked_ae_forward.1} parent=63 // pred_region
          %s1047 = sand.u32 %s226, 1
          %s1048 = scalar_lea.sflag [#allocation3], %s1047
          %s1049 = sand.u32 %s226, 1
          %s1050 = smul.addr %s1049, 64
          %s1051 = scalar_lea.vmem [#allocation2], %s1050
          %1052 = dma.done %s1048, 1024
        $region68: #{stacked_ae_forward.1} parent=63 // pred_fallthru
          _
      $region64: #{stacked_ae_forward.1} parent=5 // pred_fallthru
        _
    $region6: #{stacked_ae_forward.1} parent=1 // loop_footer
      %s22 = sadd.s32 1, %s18
    $region7: #{stacked_ae_forward.1} parent=1 // loop_footer_branch
      %17 = sbr.rel target = $region3
    $region8: #{stacked_ae_forward.1} parent=1 // loop_exit
      _
    %1053 = vsyncpa [#allocation3], 1
    %s1054 = scalar_lea.sflag [#allocation3], 1
    %1055 = vsyncpa %s1054, 1

</llo_original>
